<compile_context>
chip_gen: v7x
topology: tpu7x:2x2x1
jax: 0.10.0
libtpu: 0.0.40
codegen_flags: <defaults>
</compile_context>

<pallas_src>
import functools
import math

import jax
import jax.numpy as jnp
from jax.experimental import pallas as pl
from jax.experimental.pallas import tpu as pltpu

_INV_SQRT2 = 1.0 / math.sqrt(2.0)
_TANH_C = math.sqrt(2.0 / math.pi)


# ----------------------------------------------------------------------------
# Kernel bodies
# ----------------------------------------------------------------------------
def _gelu(gate, approximate):
    if approximate:
        # tanh approximation rides the EUP slot (opt-in; not bit-exact vs torch)
        return 0.5 * gate * (1.0 + jnp.tanh(_TANH_C * (gate + 0.044715 * gate * gate * gate)))
    return 0.5 * gate * (1.0 + jax.lax.erf(gate * _INV_SQRT2))


def _mask_k(x, ws, k_rem):
    """Zero out the invalid tail of a partial K block (x cols / W rows)."""
    col = jax.lax.broadcasted_iota(jnp.int32, x.shape, 1)
    x = jnp.where(col < k_rem, x, 0).astype(x.dtype)
    out_ws = []
    for w in ws:
        row = jax.lax.broadcasted_iota(jnp.int32, w.shape, 0)
        out_ws.append(jnp.where(row < k_rem, w, 0).astype(w.dtype))
    return x, out_ws


def _geglu_fused_kernel(x_ref, w_ref, b_ref, o_ref, acc_ref, *,
                        dim_out, k_rem, approximate):
    # x_ref: (tm, tk)   w_ref: (tk, 2*dim_out)   b_ref: (1, 2*dim_out)
    # o_ref: (tm, dim_out)   acc_ref: (tm, 2*dim_out) f32
    k = pl.program_id(2)
    nk = pl.num_programs(2)

    @pl.when(k == 0)
    def _():
        acc_ref[...] = jnp.zeros_like(acc_ref)

    def step(x, w):
        acc_ref[...] += jnp.dot(x, w, preferred_element_type=jnp.float32)

    if k_rem is None:
        step(x_ref[...], w_ref[...])
    else:
        @pl.when(k < nk - 1)
        def _():
            step(x_ref[...], w_ref[...])

        @pl.when(k == nk - 1)
        def _():
            x, (w,) = _mask_k(x_ref[...], (w_ref[...],), k_rem)
            step(x, w)

    @pl.when(k == nk - 1)
    def _():
        proj = acc_ref[...] + b_ref[...]
        val = proj[:, :dim_out]
        gate = proj[:, dim_out:]
        o_ref[...] = (val * _gelu(gate, approximate)).astype(o_ref.dtype)


def _geglu_split_kernel(x_ref, wv_ref, wg_ref, bv_ref, bg_ref, o_ref,
                        acc_v, acc_g, *, k_rem, approximate):
    # x_ref: (tm, tk)   wv/wg: (tk, tn) aliased views of the same HBM buffer
    # bv/bg: (1, tn)    o_ref: (tm, tn)   acc_v/acc_g: (tm, tn) f32
    k = pl.program_id(2)
    nk = pl.num_programs(2)

    @pl.when(k == 0)
    def _():
        acc_v[...] = jnp.zeros_like(acc_v)
        acc_g[...] = jnp.zeros_like(acc_g)

    def step(x, wv, wg):
        acc_v[...] += jnp.dot(x, wv, preferred_element_type=jnp.float32)
        acc_g[...] += jnp.dot(x, wg, preferred_element_type=jnp.float32)

    if k_rem is None:
        step(x_ref[...], wv_ref[...], wg_ref[...])
    else:
        @pl.when(k < nk - 1)
        def _():
            step(x_ref[...], wv_ref[...], wg_ref[...])

        @pl.when(k == nk - 1)
        def _():
            x, (wv, wg) = _mask_k(x_ref[...], (wv_ref[...], wg_ref[...]), k_rem)
            step(x, wv, wg)

    @pl.when(k == nk - 1)
    def _():
        val = acc_v[...] + bv_ref[...]
        gate = acc_g[...] + bg_ref[...]
        o_ref[...] = (val * _gelu(gate, approximate)).astype(o_ref.dtype)


# ----------------------------------------------------------------------------
# Tile / hardware helpers
# ----------------------------------------------------------------------------
def _device_kind():
    try:
        return jax.devices()[0].device_kind.lower()
    except Exception:
        return ""


def _is_v7(kind):
    return ("v7" in kind) or ("7x" in kind)


def _physical_vmem_bytes(kind):
    try:
        return int(pltpu.get_tpu_info().vmem_capacity_bytes)
    except Exception:
        pass
    return (64 if _is_v7(kind) else 128) * 1024 * 1024


def _default_tiles(kind):
    if "v6" in kind:
        # v6e has the worst compute/HBM ratio but the most VMEM -> wider N tile
        return 512, 1024, 512
    return 512, 512, 512


def _fit_tile(dim, want, mult):
    """Largest tile <= want that is a multiple of `mult` and divides `dim`;
    falls back to the full dim (always a legal block shape)."""
    if dim <= want or dim % mult != 0:
        return dim
    t = (want // mult) * mult
    while t > 0 and dim % t != 0:
        t -= mult
    return t if t > 0 else dim


def _pick_tk(dim_in, want):
    """Returns (tk, k_rem).  k_rem is None for exact tiling; otherwise the
    number of valid rows in the last (ragged) K block, handled by in-kernel
    masking, so weight blocks stay bounded even for non-128-multiple dims."""
    if dim_in <= want:
        return dim_in, None
    if dim_in % 128 == 0:
        tk = _fit_tile(dim_in, want, 128)
        if tk >= 256:
            return tk, None
    tk = want
    rem = dim_in % tk
    return tk, (rem if rem else None)


# ----------------------------------------------------------------------------
# Wrapper
# ----------------------------------------------------------------------------
def geglu(x, w, b, *, out_dtype=None, tm=None, tn=None, tk=None,
          approximate_gelu=False):
    """x: (M, dim_in); w: (dim_in, 2*dim_out)  (x @ W layout); b: (2*dim_out,)."""
    M, dim_in = x.shape
    dim_out = w.shape[1] // 2
    out_dtype = out_dtype or x.dtype
    kind = _device_kind()

    tm_d, tn_d, tk_d = _default_tiles(kind)
    tm = tm or tm_d
    tn = tn or tn_d
    tk = tk or tk_d

    tm = M if M < tm else tm                 # default tm is a multiple of 8
    tn = _fit_tile(dim_out, tn, 128)         # lane-dense output stores
    tk, k_rem = _pick_tk(dim_in, tk)         # exact or ragged+masked K tiles
    n_blk = dim_out // tn
    grid_m = pl.cdiv(M, tm)

    # v7x has 2 TensorCores: avoid a degenerate (1,1,K) parallel grid.
    if _is_v7(kind) and grid_m * n_blk < 2:
        if dim_out % 256 == 0:
            tn = dim_out // 2                # multiple of 128 by construction
            n_blk = 2
        elif M >= 9:
            tm = max(8, ((pl.cdiv(M, 2) + 7) // 8) * 8)
            grid_m = pl.cdiv(M, tm)

    in_isz = jnp.dtype(x.dtype).itemsize
    out_isz = jnp.dtype(out_dtype).itemsize

    def _working_set(tm_):
        return (2 * tm_ * tk * in_isz            # x block, double buffered
                + 2 * tk * (2 * tn) * in_isz     # weight stream (both halves)
                + 2 * tm_ * tn * out_isz         # output block
                + tm_ * (2 * tn) * 4             # f32 accumulator(s)
                + 4 * (2 * tn) * 4)              # bias blocks

    phys = _physical_vmem_bytes(kind)
    vmem_cap = int(0.75 * phys)                  # ~48 MiB v7x, ~96 MiB v5e/v6e
    # Large non-128-multiple dim_out forces tn=dim_out; shrink tm to fit VMEM.
    while _working_set(tm) > vmem_cap and tm > 64 and tm % 2 == 0:
        tm //= 2
        grid_m = pl.cdiv(M, tm)
    # TODO(synk): truly huge odd dim_out could still overflow VMEM; would need
    # ragged N tiling with masked stores to bound the weight block there.

    working_set = _working_set(tm)
    vmem_limit = int(min(max(int(1.25 * working_set), 32 * 1024 * 1024),
                         vmem_cap))

    nk = pl.cdiv(dim_in, tk)
    grid = (grid_m, n_blk, nk)

    b2 = b.reshape(1, 2 * dim_out).astype(jnp.float32)

    cost = pl.CostEstimate(
        flops=2 * M * dim_in * (2 * dim_out),
        transcendentals=M * dim_out,
        bytes_accessed=(x.size * in_isz + w.size * in_isz
                        + b2.size * 4 + M * dim_out * out_isz),
    )
    cparams = pltpu.CompilerParams(
        dimension_semantics=("parallel", "parallel", "arbitrary"),
        vmem_limit_bytes=vmem_limit,
    )
    out_shape = jax.ShapeDtypeStruct((M, dim_out), out_dtype)

    if n_blk == 1:
        # Fused single-dot kernel: W read as one (tk, 2*dim_out) block.
        kernel = functools.partial(_geglu_fused_kernel, dim_out=dim_out,
                                   k_rem=k_rem, approximate=approximate_gelu)
        return pl.pallas_call(
            kernel,
            out_shape=out_shape,
            grid_spec=pltpu.PrefetchScalarGridSpec(
                num_scalar_prefetch=0,
                grid=grid,
                in_specs=[
                    pl.BlockSpec((tm, tk), lambda i, j, k: (i, k)),
                    pl.BlockSpec((tk, 2 * dim_out), lambda i, j, k: (k, 0)),
                    pl.BlockSpec((1, 2 * dim_out), lambda i, j, k: (0, 0)),
                ],
                out_specs=pl.BlockSpec((tm, tn), lambda i, j, k: (i, j)),
                scratch_shapes=[pltpu.VMEM((tm, 2 * dim_out), jnp.float32)],
            ),
            compiler_params=cparams,
            cost_estimate=cost,
        )(x, w, b2)

    # Split kernel: W passed twice (zero-copy alias), gate half offset by
    # n_blk output blocks so both halves are tiled out of the same HBM buffer.
    kernel = functools.partial(_geglu_split_kernel, k_rem=k_rem,
                               approximate=approximate_gelu)
    return pl.pallas_call(
        kernel,
        out_shape=out_shape,
        grid_spec=pltpu.PrefetchScalarGridSpec(
            num_scalar_prefetch=0,
            grid=grid,
            in_specs=[
                pl.BlockSpec((tm, tk), lambda i, j, k: (i, k)),
                pl.BlockSpec((tk, tn), lambda i, j, k: (k, j)),
                pl.BlockSpec((tk, tn), lambda i, j, k: (k, j + n_blk)),
                pl.BlockSpec((1, tn), lambda i, j, k: (0, j)),
                pl.BlockSpec((1, tn), lambda i, j, k: (0, j + n_blk)),
            ],
            out_specs=pl.BlockSpec((tm, tn), lambda i, j, k: (i, j)),
            scratch_shapes=[pltpu.VMEM((tm, tn), jnp.float32),
                            pltpu.VMEM((tm, tn), jnp.float32)],
        ),
        compiler_params=cparams,
        cost_estimate=cost,
    )(x, w, w, b2, b2)


def geglu_module(x, w, b, *, compute_dtype="auto", approximate_gelu=False,
                 tm=None, tn=None, tk=None):
    """GEGLU on x of shape (..., dim_in).

    w: (dim_in, 2*dim_out)  (x @ W layout, i.e. torch weight transposed)
    b: (2*dim_out,)
    compute_dtype: "auto" (default) picks bf16 for large shapes (f32 acc),
                   None keeps the input dtype, or pass an explicit dtype.
    """
    dim_in = x.shape[-1]
    dim_out = w.shape[1] // 2
    lead = x.shape[:-1]
    out_dtype = x.dtype

    x2d = x.reshape(-1, dim_in)

    if isinstance(compute_dtype, str) and compute_dtype == "auto":
        big = dim_in >= 512 and dim_out >= 512 and x.dtype == jnp.float32
        compute_dtype = jnp.bfloat16 if big else None

    if compute_dtype is not None:
        x2d = x2d.astype(compute_dtype)
        if w.dtype != jnp.dtype(compute_dtype):
            # TODO(synk): store W in the compute dtype at init time to avoid
            # this per-call cast (it is an extra HBM pass over the weights).
            w = w.astype(compute_dtype)

    out2d = geglu(x2d, w, b, out_dtype=out_dtype, tm=tm, tn=tn, tk=tk,
                  approximate_gelu=approximate_gelu)
    return out2d.reshape(*lead, dim_out)


# ----------------------------------------------------------------------------
# Reference + tests
# ----------------------------------------------------------------------------
def _geglu_ref(x, w, b):
    proj = jnp.dot(x, w) + b
    dim_out = w.shape[1] // 2
    val, gate = proj[..., :dim_out], proj[..., dim_out:]
    return val * (0.5 * gate * (1.0 + jax.lax.erf(gate * _INV_SQRT2)))


def _make_inputs(key, dim_in, dim_out, lead_shape):
    kx, kw, kb = jax.random.split(key, 3)
    x = jax.random.normal(kx, lead_shape + (dim_in,), dtype=jnp.float32)
    bound = 1.0 / math.sqrt(dim_in)
    # nn.Linear(dim_in, 2*dim_out): weight (2*dim_out, dim_in), bias (2*dim_out,)
    w_torch = jax.random.uniform(kw, (2 * dim_out, dim_in),
                                 minval=-bound, maxval=bound, dtype=jnp.float32)
    b = jax.random.uniform(kb, (2 * dim_out,),
                           minval=-bound, maxval=bound, dtype=jnp.float32)
    return x, w_torch.T, b  # w in (dim_in, 2*dim_out) layout for x @ W


if __name__ == "__main__":
    key = jax.random.PRNGKey(0)
    k1, k2, k3, k4 = jax.random.split(key, 4)

    # 1) small module-shaped test: batch=2, seq=8, dim_in=32, dim_out=32 (f32,
    #    fused single-block path).
    x1, w1, b1 = _make_inputs(k1, 32, 32, (2, 8))
    out1 = jax.block_until_ready(geglu_module(x1, w1, b1, compute_dtype=None))
    ref1 = _geglu_ref(x1, w1, b1)
    assert out1.shape == (2, 8, 32), out1.shape
    assert jnp.allclose(out1, ref1, atol=1e-5, rtol=1e-5), float(
        jnp.max(jnp.abs(out1 - ref1)))

    # 2) multi-K-tile + multi-N-tile (split kernel, W aliased twice), f32.
    x2, w2, b2 = _make_inputs(k2, 1024, 1024, (64,))
    out2 = jax.block_until_ready(
        geglu_module(x2, w2, b2, compute_dtype=None, tn=512))
    ref2 = _geglu_ref(x2, w2, b2)
    assert out2.shape == (64, 1024), out2.shape
    assert jnp.allclose(out2, ref2, atol=1e-4, rtol=1e-4), float(
        jnp.max(jnp.abs(out2 - ref2)))

    # 3) default "auto" path -> bf16 MXU compute (f32 accumulation).
    out3 = jax.block_until_ready(geglu_module(x2, w2, b2))
    assert jnp.allclose(out3, ref2, atol=5e-2, rtol=5e-2), float(
        jnp.max(jnp.abs(out3 - ref2)))

    # 4) ragged K (dim_in=1088, not a multiple of 128) on the fused kernel.
    x4, w4, b4 = _make_inputs(k3, 1088, 192, (32,))
    out4 = jax.block_until_ready(geglu_module(x4, w4, b4, compute_dtype=None))
    ref4 = _geglu_ref(x4, w4, b4)
    assert jnp.allclose(out4, ref4, atol=1e-4, rtol=1e-4), float(
        jnp.max(jnp.abs(out4 - ref4)))

    # 5) ragged K on the split kernel (two N tiles).
    x5, w5, b5 = _make_inputs(k4, 1088, 512, (32,))
    out5 = jax.block_until_ready(
        geglu_module(x5, w5, b5, compute_dtype=None, tn=256))
    ref5 = _geglu_ref(x5, w5, b5)
    assert jnp.allclose(out5, ref5, atol=1e-4, rtol=1e-4), float(
        jnp.max(jnp.abs(out5 - ref5)))

    print("KERNEL_OK")
</pallas_src>

<mosaic_0001>
module attributes {stable_mosaic.version = 11 : i64} {
  func.func @_geglu_fused_kernel(%arg0: i32, %arg1: i32, %arg2: i32, %arg3: memref<16x32xf32, #tpu.memory_space<vmem>>, %arg4: memref<32x64xf32, #tpu.memory_space<vmem>>, %arg5: memref<1x64xf32, #tpu.memory_space<vmem>>, %arg6: memref<16x32xf32, #tpu.memory_space<vmem>>, %arg7: memref<16x64xf32, #tpu.memory_space<vmem>>) attributes {dimension_semantics = [#tpu.dimension_semantics<parallel>, #tpu.dimension_semantics<parallel>, #tpu.dimension_semantics<arbitrary>], iteration_bounds = array<i64: 1, 1, 1>, scalar_prefetch = 0 : i64, scratch_operands = 1 : i64, tpu.core_type = #tpu.core_type<tc>, window_params = [{transform_indices = @transform_0, window_bounds = array<i64: 16, 32>}, {transform_indices = @transform_1, window_bounds = array<i64: 32, 64>}, {pipeline_mode = #tpu.pipeline_mode<synchronous>, transform_indices = @transform_2, window_bounds = array<i64: 1, 64>}, {transform_indices = @transform_3, window_bounds = array<i64: 16, 32>}]} {
    %c0_i32 = arith.constant 0 : i32
    %0 = arith.cmpi eq, %arg2, %c0_i32 : i32
    %1 = arith.extui %0 : i1 to i32
    %c0_i32_0 = arith.constant 0 : i32
    %2 = arith.cmpi ne, %1, %c0_i32_0 : i32
    scf.if %2 {
      %cst_10 = arith.constant 0.000000e+00 : f32
      %12 = vector.broadcast %cst_10 : f32 to vector<16x64xf32>
      %c0_11 = arith.constant 0 : index
      %c0_12 = arith.constant 0 : index
      %13 = vector.load %arg7[%c0_11, %c0_12] : memref<16x64xf32, #tpu.memory_space<vmem>>, vector<16x64xf32>
      tpu.vector_store %arg7[%c0_11, %c0_12], %12 {strides = array<i32>} : memref<16x64xf32, #tpu.memory_space<vmem>>, vector<16x64xf32>,
    } else {
    }
    %c0 = arith.constant 0 : index
    %c0_1 = arith.constant 0 : index
    %3 = vector.load %arg3[%c0, %c0_1] : memref<16x32xf32, #tpu.memory_space<vmem>>, vector<16x32xf32>
    %c0_2 = arith.constant 0 : index
    %c0_3 = arith.constant 0 : index
    %4 = vector.load %arg4[%c0_2, %c0_3] : memref<32x64xf32, #tpu.memory_space<vmem>>, vector<32x64xf32>
    %c0_4 = arith.constant 0 : index
    %c0_5 = arith.constant 0 : index
    %5 = vector.load %arg7[%c0_4, %c0_5] : memref<16x64xf32, #tpu.memory_space<vmem>>, vector<16x64xf32>
    %cst = arith.constant dense<0.000000e+00> : vector<16x64xf32>
    %6 = tpu.matmul %3, %4, %cst {dimension_numbers = #tpu.dot_dimension_numbers<[1], [0], [0], [1], [0, 0, 1, 1], [], []>} : vector<16x32xf32>, vector<32x64xf32>, vector<16x64xf32> -> vector<16x64xf32>
    %7 = arith.addf %5, %6 : vector<16x64xf32>
    %c0_6 = arith.constant 0 : index
    %c0_7 = arith.constant 0 : index
    %8 = vector.load %arg7[%c0_6, %c0_7] : memref<16x64xf32, #tpu.memory_space<vmem>>, vector<16x64xf32>
    tpu.vector_store %arg7[%c0_6, %c0_7], %7 {strides = array<i32>} : memref<16x64xf32, #tpu.memory_space<vmem>>, vector<16x64xf32>,
    %c0_i32_8 = arith.constant 0 : i32
    %9 = arith.cmpi eq, %arg2, %c0_i32_8 : i32
    %10 = arith.extui %9 : i1 to i32
    %c0_i32_9 = arith.constant 0 : i32
    %11 = arith.cmpi ne, %10, %c0_i32_9 : i32
    scf.if %11 {
      %c0_10 = arith.constant 0 : index
      %c0_11 = arith.constant 0 : index
      %12 = vector.load %arg7[%c0_10, %c0_11] : memref<16x64xf32, #tpu.memory_space<vmem>>, vector<16x64xf32>
      %c0_12 = arith.constant 0 : index
      %c0_13 = arith.constant 0 : index
      %13 = vector.load %arg5[%c0_12, %c0_13] : memref<1x64xf32, #tpu.memory_space<vmem>>, vector<1x64xf32>
      %14 = vector.broadcast %13 : vector<1x64xf32> to vector<16x64xf32>
      %15 = arith.addf %12, %14 : vector<16x64xf32>
      %16 = vector.extract_strided_slice %15 {offsets = [0, 0], sizes = [16, 32], strides = [1, 1]} : vector<16x64xf32> to vector<16x32xf32>
      %17 = vector.extract_strided_slice %15 {offsets = [0, 32], sizes = [16, 32], strides = [1, 1]} : vector<16x64xf32> to vector<16x32xf32>
      %cst_14 = arith.constant 5.000000e-01 : f32
      %18 = vector.broadcast %cst_14 : f32 to vector<16x32xf32>
      %19 = arith.mulf %18, %17 : vector<16x32xf32>
      %cst_15 = arith.constant 0.707106769 : f32
      %20 = vector.broadcast %cst_15 : f32 to vector<16x32xf32>
      %21 = arith.mulf %17, %20 : vector<16x32xf32>
      %22 = math.erf %21 : vector<16x32xf32>
      %cst_16 = arith.constant 1.000000e+00 : f32
      %23 = vector.broadcast %cst_16 : f32 to vector<16x32xf32>
      %24 = arith.addf %23, %22 : vector<16x32xf32>
      %25 = arith.mulf %19, %24 : vector<16x32xf32>
      %26 = arith.mulf %16, %25 : vector<16x32xf32>
      %c0_17 = arith.constant 0 : index
      %c0_18 = arith.constant 0 : index
      %27 = vector.load %arg6[%c0_17, %c0_18] : memref<16x32xf32, #tpu.memory_space<vmem>>, vector<16x32xf32>
      tpu.vector_store %arg6[%c0_17, %c0_18], %26 {strides = array<i32>} : memref<16x32xf32, #tpu.memory_space<vmem>>, vector<16x32xf32>,
    } else {
    }
    return
  }
  func.func @transform_0(%arg0: i32, %arg1: i32, %arg2: i32) -> (i32, i32) {
    %c0_i32 = arith.constant 0 : i32
    return %arg0, %arg2 : i32, i32
  }
  func.func @transform_1(%arg0: i32, %arg1: i32, %arg2: i32) -> (i32, i32) {
    %c0_i32 = arith.constant 0 : i32
    %c0_i32_0 = arith.constant 0 : i32
    return %arg2, %c0_i32 : i32, i32
  }
  func.func @transform_2(%arg0: i32, %arg1: i32, %arg2: i32) -> (i32, i32) {
    %c0_i32 = arith.constant 0 : i32
    %c0_i32_0 = arith.constant 0 : i32
    %c0_i32_1 = arith.constant 0 : i32
    return %c0_i32, %c0_i32_0 : i32, i32
  }
  func.func @transform_3(%arg0: i32, %arg1: i32, %arg2: i32) -> (i32, i32) {
    %c0_i32 = arith.constant 0 : i32
    return %arg0, %arg1 : i32, i32
  }
}

</mosaic_0001>

<llo_original>
// kernel: tpu_custom_call.1
$region0: #{tpu_custom_call.1}
  #allocation0 [shape = 'u32[]', space=smem, size = 0x4, offset = 0x4, fixed_abs, tag = 'smem constant byte address 0x4 - core index']
  #allocation1 [shape = 'u32[144,128]{1,0:T(1,128)}', space=vmem, size = 0x12000, scoped, tag = 'internal scratch']
  #allocation2 [shape = 'f32[16,64]{1,0:T(8,128)}', space=vmem, size = 0x2000, scoped, tag = 'scratch operand']
  %s0 = inlined_call_operand.hbm [shape: f32[16,32], index: 0, kind: input, shape index: {}]
  %s1 = inlined_call_operand.hbm [shape: f32[32,64], index: 1, kind: input, shape index: {}]
  %s2 = inlined_call_operand.vmem [shape: f32[1,64], index: 2, kind: input, shape index: {}]
  %s3 = inlined_call_operand.hbm [shape: f32[16,32], index: 3, kind: output, shape index: {}]
  %s4 = sld [smem:[#allocation0]]
  $region38: #{tpu_custom_call.1} parent=0
    _
  %s6 = ssub.s32 1, %s4
  %s7 = scalar_select 0, %s6, %s4
  $region1: #{tpu_custom_call.1} parent=0
    #allocation3 [shape = 'u8[8192]{0}', space=vmem, size = 0x2000, scoped, tag = 'input window, operand 0, single buffered']
    #allocation4 [shape = 's32[1]{0}', space=sflag, size = 0x4, scoped, tag = 'scoped memory for tpu_custom_call.1']
    #allocation5 [shape = 's32[1]{0}', space=sflag, size = 0x4, scoped, tag = 'scoped memory for tpu_custom_call.1']
    #allocation6 [shape = 'u8[16384]{0}', space=vmem, size = 0x4000, scoped, tag = 'input window, operand 1, single buffered']
    #allocation7 [shape = 's32[1]{0}', space=sflag, size = 0x4, scoped, tag = 'scoped memory for tpu_custom_call.1']
    #allocation8 [shape = 'u8[8192]{0}', space=vmem, size = 0x2000, scoped, tag = 'output window, operand 0, single buffered']
    %8 = vsyncpa [#allocation4], 0
    %9 = vsyncpa [#allocation7], 0
    %10 = vsyncpa [#allocation5], 0
    // Predicated region
    $region2: #{tpu_custom_call.1} parent=1 // pred_check
      _
    $region3: #{tpu_custom_call.1} parent=1 // pred_check_branch
      %12 = sbr.rel (0) target = $region5
    $region4: #{tpu_custom_call.1} parent=1 // pred_region
      %s14 = ssub.s32 256, 256
      %15 = vsyncadd [#allocation4], %s14
      %s16 = sshll.u32 [#allocation3], 4
      %s17 = int_to_ptr.vmem [resolvable:$true] %s16
      %22 = dma.hbm_to_vmem [thread:$0]  %s0, 256, %s17, [#allocation4], 128, 128, 8
    $region5: #{tpu_custom_call.1} parent=1 // pred_fallthru
      _
    // Predicated region
    $region6: #{tpu_custom_call.1} parent=1 // pred_check
      _
    $region7: #{tpu_custom_call.1} parent=1 // pred_check_branch
      %24 = sbr.rel (0) target = $region9
    $region8: #{tpu_custom_call.1} parent=1 // pred_region
      %s26 = ssub.s32 512, 512
      %27 = vsyncadd [#allocation7], %s26
      %s28 = sshll.u32 [#allocation6], 4
      %s29 = int_to_ptr.vmem [resolvable:$true] %s28
      %34 = dma.hbm_to_vmem [thread:$0]  %s1, 512, %s29, [#allocation7], 128, 128, 8
    $region9: #{tpu_custom_call.1} parent=1 // pred_fallthru
      _
    // Predicated region
    $region10: #{tpu_custom_call.1} parent=1 // pred_check
      _
    $region11: #{tpu_custom_call.1} parent=1 // pred_check_branch
      %36 = sbr.rel (0) target = $region13
    $region12: #{tpu_custom_call.1} parent=1 // pred_region
      _
    $region13: #{tpu_custom_call.1} parent=1 // pred_fallthru
      _
    // Predicated region
    $region14: #{tpu_custom_call.1} parent=1 // pred_check
      _
    $region15: #{tpu_custom_call.1} parent=1 // pred_check_branch
      %38 = sbr.rel (0) target = $region17
    $region16: #{tpu_custom_call.1} parent=1 // pred_region
      %39 = dma.done [#allocation4], 256
    $region17: #{tpu_custom_call.1} parent=1 // pred_fallthru
      _
    // Predicated region
    $region18: #{tpu_custom_call.1} parent=1 // pred_check
      _
    $region19: #{tpu_custom_call.1} parent=1 // pred_check_branch
      %41 = sbr.rel (0) target = $region21
    $region20: #{tpu_custom_call.1} parent=1 // pred_region
      %42 = dma.done [#allocation7], 512
    $region21: #{tpu_custom_call.1} parent=1 // pred_fallthru
      _
    %p43 = scmp.eq.s32.totalorder 0, 0
    // Predicated region
    $region22: #{tpu_custom_call.1} parent=1 // pred_check
      %p44 = pneg %p43
    $region23: #{tpu_custom_call.1} parent=1 // pred_check_branch
      %46 = sbr.rel (%p44) target = $region25
    $region24: #{tpu_custom_call.1} parent=1 // pred_region
      %vm47 = vcmask 523264
      %48 = vst.msk [vmem:[#allocation2] sm:$0xff] %vm47, 0.0
      %49 = vst.msk [vmem:[#allocation2 + $0x8] sm:$0xff] %vm47, 0.0
    $region25: #{tpu_custom_call.1} parent=1 // pred_fallthru
      _
    %v50 = vld [vmem:[#allocation3] sm:$0xff]
    %v51 = vld [vmem:[#allocation3 + $0x8] sm:$0xff]
    %v52 = vld [vmem:[#allocation6] sm:$0xff]
    %v53 = vld [vmem:[#allocation6 + $0x8] sm:$0xff]
    %v54 = vld [vmem:[#allocation6 + $0x10] sm:$0xff]
    %v55 = vld [vmem:[#allocation6 + $0x18] sm:$0xff]
    %v56 = vld [vmem:[#allocation2] sm:$0xff]
    %v57 = vld [vmem:[#allocation2 + $0x8] sm:$0xff]
    %vm58 = vcmask 261120
    %v60 = vsel %vm58, %v50, 0
    %v63 = vsel %vm58, %v51, 0
    %65 = vmatprep.subr.mxu0 0.0
    %66 = vmatpush1.msra.mxu0 %v52
    %67 = vmatprep.subr.mxu0 0.0
    %68 = vmatpush1.msra.mxu0 %v53
    %69 = vmatprep.subr.mxu0 0.0
    %70 = vmatpush1.msra.mxu0 %v54
    %71 = vmatprep.subr.mxu0 0.0
    %72 = vmatpush1.msra.mxu0 %v55
    %73 = vmatprep.subr.mxu0 0.0
    %74 = vmatpush1.msra.mxu0 0.0
    %75 = vmatprep.subr.mxu0 0.0
    %76 = vmatpush1.msra.mxu0 0.0
    %77 = vmatprep.subr.mxu0 0.0
    %78 = vmatpush1.msra.mxu0 0.0
    %79 = vmatprep.subr.mxu0 0.0
    %80 = vmatpush1.msra.mxu0 0.0
    %81 = vmatprep.subr.mxu0 0.0
    %82 = vmatpush1.msra.mxu0 0.0
    %83 = vmatprep.subr.mxu0 0.0
    %84 = vmatpush1.msra.mxu0 0.0
    %85 = vmatprep.subr.mxu0 0.0
    %86 = vmatpush1.msra.mxu0 0.0
    %87 = vmatprep.subr.mxu0 0.0
    %88 = vmatpush1.msra.mxu0 0.0
    %89 = vmatprep.subr.mxu0 0.0
    %90 = vmatpush1.msra.mxu0 0.0
    %91 = vmatprep.subr.mxu0 0.0
    %92 = vmatpush1.msra.mxu0 0.0
    %93 = vmatprep.subr.mxu0 0.0
    %94 = vmatpush1.msra.mxu0 0.0
    %95 = vmatprep.subr.mxu0 0.0
    %96 = vmatpush1.msra.mxu0 0.0
    %97 = vmatprep.subr.mxu0 0.0
    %98 = vmatpush1.msra.mxu0 0.0
    %99 = vmatprep.subr.mxu0 0.0
    %100 = vmatpush1.msra.mxu0 0.0
    %101 = vmatprep.subr.mxu0 0.0
    %102 = vmatpush1.msra.mxu0 0.0
    %103 = vmatprep.subr.mxu0 0.0
    %104 = vmatpush1.msra.mxu0 0.0
    %105 = vmatprep.subr.mxu0 0.0
    %106 = vmatpush1.msra.mxu0 0.0
    %107 = vmatprep.subr.mxu0 0.0
    %108 = vmatpush1.msra.mxu0 0.0
    %109 = vmatprep.subr.mxu0 0.0
    %110 = vmatpush1.msra.mxu0 0.0
    %111 = vmatprep.subr.mxu0 0.0
    %112 = vmatpush1.msra.mxu0 0.0
    %113 = vmatprep.subr.mxu0 0.0
    %114 = vmatpush1.msra.mxu0 0.0
    %115 = vmatprep.subr.mxu0 0.0
    %116 = vmatpush1.msra.mxu0 0.0
    %117 = vmatprep.subr.mxu0 0.0
    %118 = vmatpush1.msra.mxu0 0.0
    %119 = vmatprep.subr.mxu0 0.0
    %120 = vmatpush1.msra.mxu0 0.0
    %121 = vmatprep.subr.mxu0 0.0
    %122 = vmatpush1.msra.mxu0 0.0
    %123 = vmatprep.subr.mxu0 0.0
    %124 = vmatpush1.msra.mxu0 0.0
    %125 = vmatprep.subr.mxu0 0.0
    %126 = vmatpush1.msra.mxu0 0.0
    %127 = vmatprep.subr.mxu0 0.0
    %128 = vmatpush1.msra.mxu0 0.0
    %129 = vmatprep.mubr.f32.mxu0 0.0
    %130 = vmatmul.mubr.f32.gmra.mrb[0].mxu0 %v60
    %v131 = vpop.f32.mrb[0].mxu0
    %v132 = vadd.f32 0.0, %v131
    %v133 = vpop.f32.mrb[0].mxu0
    %134 = vmatprep.mubr.f32.mxu0 0.0
    %135 = vmatmul.mubr.f32.gmra.mrb[0].mxu0 %v63
    %v136 = vpop.f32.mrb[0].mxu0
    %v137 = vadd.f32 0.0, %v136
    %v138 = vpop.f32.mrb[0].mxu0
    %139 = vdwg.mxu0
    %v140 = vadd.f32 %v56, %v132
    %v141 = vadd.f32 %v57, %v137
    %vm142 = vcmask 523264
    %143 = vst.msk [vmem:[#allocation2] sm:$0xff] %vm142, %v140
    %144 = vst.msk [vmem:[#allocation2 + $0x8] sm:$0xff] %vm142, %v141
    // Predicated region
    $region26: #{tpu_custom_call.1} parent=1 // pred_check
      %p145 = pneg %p43
    $region27: #{tpu_custom_call.1} parent=1 // pred_check_branch
      %147 = sbr.rel (%p145) target = $region29
    $region28: #{tpu_custom_call.1} parent=1 // pred_region
      %v148 = vld [vmem:[#allocation2] sm:$0xff]
      %v149 = vld [vmem:[#allocation2 + $0x8] sm:$0xff]
      %v150 = vld [vmem:[%s2] sm:$0x1]
      %v152 = vlaneseq
      %v153 = vshrl.u32 %v152, 7
      %v154 = vsub.s32 0, %v153
      %v155 = vrot.slane %v150, %v154
      %v157 = vadd.f32 %v148, %v155
      %v158 = vadd.f32 %v149, %v155
      %v159 = vmul.f32 %v157, 0.5
      %v160 = vmul.f32 %v158, 0.5
      %v161 = vmul.f32 %v157, 0.70710677
      %v162 = vmul.f32 %v158, 0.70710677
      %v163 = verf.f32.pop %v161
      %v164 = verf.f32.pop %v162
      %v165 = vadd.f32 %v163, 1.0
      %v166 = vadd.f32 %v164, 1.0
      %v167 = vmul.f32 %v159, %v165
      %v168 = vmul.f32 %v160, %v166
      %171 = vrot.lane.b32.xlu0 %v167, 96
      %v172 = vpop.permute.xlu0 %171
      %173 = vrot.lane.b32.xlu0 %v168, 96
      %v174 = vpop.permute.xlu0 %173
      %v177 = vmul.f32 %v157, %v172
      %v178 = vmul.f32 %v158, %v174
      %179 = vst.msk [vmem:[#allocation8] sm:$0xff] %vm58, %v177
      %180 = vst.msk [vmem:[#allocation8 + $0x8] sm:$0xff] %vm58, %v178
    $region29: #{tpu_custom_call.1} parent=1 // pred_fallthru
      _
    // Predicated region
    $region30: #{tpu_custom_call.1} parent=1 // pred_check
      _
    $region31: #{tpu_custom_call.1} parent=1 // pred_check_branch
      %182 = sbr.rel (0) target = $region33
    $region32: #{tpu_custom_call.1} parent=1 // pred_region
      %s184 = ssub.s32 256, 256
      %185 = vsyncadd [#allocation5], %s184
      %s186 = sshll.u32 [#allocation8], 4
      %s187 = int_to_ptr.vmem [resolvable:$true] %s186
      %192 = dma.vmem_to_hbm [thread:$0]  %s187, 256, %s3, [#allocation5], 128, 128, 8
    $region33: #{tpu_custom_call.1} parent=1 // pred_fallthru
      _
    // Predicated region
    $region34: #{tpu_custom_call.1} parent=1 // pred_check
      _
    $region35: #{tpu_custom_call.1} parent=1 // pred_check_branch
      %194 = sbr.rel (0) target = $region37
    $region36: #{tpu_custom_call.1} parent=1 // pred_region
      %195 = dma.done [#allocation5], 256
    $region37: #{tpu_custom_call.1} parent=1 // pred_fallthru
      _
    %196 = vsyncpa [#allocation4], 1
    %197 = vsyncpa [#allocation7], 1
    %198 = vsyncpa [#allocation5], 1

</llo_original>
